<compile_context>
chip_gen: v5e
topology: v5e:2x2
jax: 0.10.0
libtpu: 0.0.40
codegen_flags: <defaults>
</compile_context>

<pallas_src>
import jax
import jax.numpy as jnp
from jax.experimental import pallas as pl
from jax.experimental.pallas import tpu as pltpu


def _round_up(x: int, m: int) -> int:
    return (x + m - 1) // m * m


def _mlp_kernel(x_ref, w1_ref, b1_ref, w2_ref, b2_ref, o_ref):
    # fc1: [tm, in_p] @ [in_p, h_p]  -- f32 accumulation on the MXU.
    h = jnp.dot(x_ref[...], w1_ref[...], preferred_element_type=jnp.float32)
    # bias + ReLU stay in f32 on the VPU (free filler while the MXU is busy).
    h = jnp.maximum(h + b1_ref[...], 0.0)
    # dropout(p=0.0) is the identity -> nothing to do.
    # fc2: [tm, h_p] @ [h_p, out_p]
    o = jnp.dot(h.astype(w2_ref.dtype), w2_ref[...],
                preferred_element_type=jnp.float32)
    o_ref[...] = (o + b2_ref[...]).astype(o_ref.dtype)


def mlp_transformer_forward(x, w1, b1, w2, b2, *, tm=256, compute_dtype=None):
    """x: [B, S, in_dim]; w1: [in_dim, h_dim]; b1: [h_dim];
    w2: [h_dim, out_dim]; b2: [out_dim].  Returns [B, S, out_dim].

    Weights are stored pre-transposed relative to PyTorch ([in, out]), so the
    kernel computes plain row-major matmuls (equivalent to x @ W.T + b)."""
    B, S, in_dim = x.shape
    h_dim = w1.shape[1]
    out_dim = w2.shape[1]
    out_dtype = x.dtype
    cdt = jnp.dtype(compute_dtype) if compute_dtype is not None else jnp.dtype(x.dtype)

    # ---- lane-dense padding (multiples of 128 on every feature axis) -------
    in_p = _round_up(in_dim, 128)
    h_p = _round_up(h_dim, 128)
    out_p = _round_up(out_dim, 128)

    # ---- row tiling: big tiles, 16-row granularity (covers f32 & bf16) -----
    M = B * S
    tm_eff = min(_round_up(tm, 16), _round_up(M, 16))
    M_pad = _round_up(M, tm_eff)
    grid = (M_pad // tm_eff,)

    x2d = jnp.pad(x.reshape(M, in_dim).astype(cdt),
                  ((0, M_pad - M), (0, in_p - in_dim)))
    w1p = jnp.pad(w1.astype(cdt), ((0, in_p - in_dim), (0, h_p - h_dim)))
    w2p = jnp.pad(w2.astype(cdt), ((0, h_p - h_dim), (0, out_p - out_dim)))
    b1p = jnp.pad(b1.astype(jnp.float32), (0, h_p - h_dim)).reshape(1, h_p)
    b2p = jnp.pad(b2.astype(jnp.float32), (0, out_p - out_dim)).reshape(1, out_p)

    # ---- VMEM budget: resident weights + double-buffered x/out tiles -------
    icd = cdt.itemsize
    iod = jnp.dtype(out_dtype).itemsize
    weight_bytes = (in_p * h_p + h_p * out_p) * icd + (h_p + out_p) * 4
    stream_bytes = 2 * tm_eff * (in_p * icd + out_p * iod)
    hidden_bytes = 2 * tm_eff * h_p * 4
    need = 2 * weight_bytes + stream_bytes + hidden_bytes  # 2x covers double-buffer fallback
    vmem_limit = min(max(int(need * 1.25), 32 << 20), 64 << 20)

    cost = pl.CostEstimate(
        flops=2 * M_pad * (in_p * h_p + h_p * out_p),
        transcendentals=0,
        bytes_accessed=(x2d.size * icd + (w1p.size + w2p.size) * icd
                        + (b1p.size + b2p.size) * 4 + M_pad * out_p * iod),
    )

    def run(weight_mode):
        def wspec(shape):
            if weight_mode is None:
                return pl.BlockSpec(shape, lambda i: (0, 0))
            return pl.BlockSpec(shape, lambda i: (0, 0), pipeline_mode=weight_mode)

        return pl.pallas_call(
            _mlp_kernel,
            out_shape=jax.ShapeDtypeStruct((M_pad, out_p), out_dtype),
            grid=grid,
            in_specs=[
                pl.BlockSpec((tm_eff, in_p), lambda i: (i, 0)),   # x row-tile
                wspec((in_p, h_p)),                               # w1 (resident)
                wspec((1, h_p)),                                  # b1
                wspec((h_p, out_p)),                              # w2 (resident)
                wspec((1, out_p)),                                # b2
            ],
            out_specs=pl.BlockSpec((tm_eff, out_p), lambda i: (i, 0)),
            compiler_params=pltpu.CompilerParams(
                # Row axis is data-parallel -> shards across both TCs on v7x.
                dimension_semantics=("parallel",),
                vmem_limit_bytes=vmem_limit,
            ),
            cost_estimate=cost,
        )(x2d, w1p, b1p, w2p, b2p)

    try:
        # Constant index_map on weights/biases -> single-buffer them to halve
        # resident-weight VMEM (frees room for a larger row tile).
        out2d = run(pl.Buffered(1))
    except Exception:
        # Fallback for Pallas versions without single-buffer pipeline_mode.
        out2d = run(None)

    return out2d[:M, :out_dim].reshape(B, S, out_dim)


def init_params(key, in_dim, h_dim, out_dim, dtype=jnp.float32):
    """Deterministic init mimicking nn.Linear's default (uniform +/- 1/sqrt(fan_in)).
    Weights are stored transposed relative to PyTorch ([in, out] instead of [out, in])."""
    k1, k2, k3, k4 = jax.random.split(key, 4)
    bound1 = 1.0 / (in_dim ** 0.5)
    bound2 = 1.0 / (h_dim ** 0.5)
    w1 = jax.random.uniform(k1, (in_dim, h_dim), dtype, -bound1, bound1)
    b1 = jax.random.uniform(k2, (h_dim,), dtype, -bound1, bound1)
    w2 = jax.random.uniform(k3, (h_dim, out_dim), dtype, -bound2, bound2)
    b2 = jax.random.uniform(k4, (out_dim,), dtype, -bound2, bound2)
    return w1, b1, w2, b2


if __name__ == "__main__":
    # Small shapes consistent with the transformer-MLP usage in ClipCap:
    # batch=2, seq=8, in_dim=32, h_dim=4*in_dim=128, out_d=None -> out_dim=in_dim.
    B, S, in_dim = 2, 8, 32
    h_dim, out_dim = 4 * in_dim, in_dim

    key = jax.random.PRNGKey(0)
    kx, kp = jax.random.split(key)
    x = jax.random.normal(kx, (B, S, in_dim), jnp.float32)
    w1, b1, w2, b2 = init_params(kp, in_dim, h_dim, out_dim)

    # Pure-JAX reference (dropout p=0.0 is identity).
    y_ref = jnp.maximum(x @ w1 + b1, 0.0) @ w2 + b2

    # f32 compute path: tight check.
    y = mlp_transformer_forward(x, w1, b1, w2, b2, tm=256)
    y = jax.block_until_ready(y)
    assert y.shape == (B, S, out_dim)
    assert jnp.allclose(y, y_ref, atol=1e-5, rtol=1e-5)

    # bf16 compute path (MXU-peak path for v6e/v7x): loose check.
    y_bf = mlp_transformer_forward(x, w1, b1, w2, b2, tm=256,
                                   compute_dtype=jnp.bfloat16)
    y_bf = jax.block_until_ready(y_bf)
    assert y_bf.shape == (B, S, out_dim)
    assert jnp.allclose(y_bf.astype(jnp.float32), y_ref, atol=5e-2, rtol=5e-2)

    print("KERNEL_OK")
</pallas_src>

<mosaic_0001>
module attributes {stable_mosaic.version = 11 : i64} {
  func.func @_mlp_kernel(%arg0: i32, %arg1: memref<16x128xf32, #tpu.memory_space<vmem>>, %arg2: memref<128x128xf32, #tpu.memory_space<vmem>>, %arg3: memref<1x128xf32, #tpu.memory_space<vmem>>, %arg4: memref<128x128xf32, #tpu.memory_space<vmem>>, %arg5: memref<1x128xf32, #tpu.memory_space<vmem>>, %arg6: memref<16x128xf32, #tpu.memory_space<vmem>>) attributes {dimension_semantics = [#tpu.dimension_semantics<parallel>], iteration_bounds = array<i64: 1>, scalar_prefetch = 0 : i64, scratch_operands = 0 : i64, tpu.core_type = #tpu.core_type<tc>, window_params = [{transform_indices = @transform_0, window_bounds = array<i64: 16, 128>}, {pipeline_mode = #tpu.pipeline_mode<synchronous>, transform_indices = @transform_1, window_bounds = array<i64: 128, 128>}, {pipeline_mode = #tpu.pipeline_mode<synchronous>, transform_indices = @transform_2, window_bounds = array<i64: 1, 128>}, {pipeline_mode = #tpu.pipeline_mode<synchronous>, transform_indices = @transform_3, window_bounds = array<i64: 128, 128>}, {pipeline_mode = #tpu.pipeline_mode<synchronous>, transform_indices = @transform_4, window_bounds = array<i64: 1, 128>}, {transform_indices = @transform_5, window_bounds = array<i64: 16, 128>}]} {
    %c0 = arith.constant 0 : index
    %c0_0 = arith.constant 0 : index
    %0 = vector.load %arg1[%c0, %c0_0] : memref<16x128xf32, #tpu.memory_space<vmem>>, vector<16x128xf32>
    %c0_1 = arith.constant 0 : index
    %c0_2 = arith.constant 0 : index
    %1 = vector.load %arg2[%c0_1, %c0_2] : memref<128x128xf32, #tpu.memory_space<vmem>>, vector<128x128xf32>
    %cst = arith.constant dense<0.000000e+00> : vector<16x128xf32>
    %2 = tpu.matmul %0, %1, %cst {dimension_numbers = #tpu.dot_dimension_numbers<[1], [0], [0], [1], [0, 0, 1, 1], [], []>} : vector<16x128xf32>, vector<128x128xf32>, vector<16x128xf32> -> vector<16x128xf32>
    %c0_3 = arith.constant 0 : index
    %c0_4 = arith.constant 0 : index
    %3 = vector.load %arg3[%c0_3, %c0_4] : memref<1x128xf32, #tpu.memory_space<vmem>>, vector<1x128xf32>
    %4 = vector.broadcast %3 : vector<1x128xf32> to vector<16x128xf32>
    %5 = arith.addf %2, %4 : vector<16x128xf32>
    %cst_5 = arith.constant 0.000000e+00 : f32
    %6 = vector.broadcast %cst_5 : f32 to vector<16x128xf32>
    %7 = arith.maximumf %5, %6 : vector<16x128xf32>
    %c0_6 = arith.constant 0 : index
    %c0_7 = arith.constant 0 : index
    %8 = vector.load %arg4[%c0_6, %c0_7] : memref<128x128xf32, #tpu.memory_space<vmem>>, vector<128x128xf32>
    %cst_8 = arith.constant dense<0.000000e+00> : vector<16x128xf32>
    %9 = tpu.matmul %7, %8, %cst_8 {dimension_numbers = #tpu.dot_dimension_numbers<[1], [0], [0], [1], [0, 0, 1, 1], [], []>} : vector<16x128xf32>, vector<128x128xf32>, vector<16x128xf32> -> vector<16x128xf32>
    %c0_9 = arith.constant 0 : index
    %c0_10 = arith.constant 0 : index
    %10 = vector.load %arg5[%c0_9, %c0_10] : memref<1x128xf32, #tpu.memory_space<vmem>>, vector<1x128xf32>
    %11 = vector.broadcast %10 : vector<1x128xf32> to vector<16x128xf32>
    %12 = arith.addf %9, %11 : vector<16x128xf32>
    %c0_11 = arith.constant 0 : index
    %c0_12 = arith.constant 0 : index
    %13 = vector.load %arg6[%c0_11, %c0_12] : memref<16x128xf32, #tpu.memory_space<vmem>>, vector<16x128xf32>
    tpu.vector_store %arg6[%c0_11, %c0_12], %12 {strides = array<i32>} : memref<16x128xf32, #tpu.memory_space<vmem>>, vector<16x128xf32>,
    return
  }
  func.func @transform_0(%arg0: i32) -> (i32, i32) {
    %c0_i32 = arith.constant 0 : i32
    %c0_i32_0 = arith.constant 0 : i32
    return %arg0, %c0_i32 : i32, i32
  }
  func.func @transform_1(%arg0: i32) -> (i32, i32) {
    %c0_i32 = arith.constant 0 : i32
    %c0_i32_0 = arith.constant 0 : i32
    %c0_i32_1 = arith.constant 0 : i32
    return %c0_i32, %c0_i32_0 : i32, i32
  }
  func.func @transform_2(%arg0: i32) -> (i32, i32) {
    %c0_i32 = arith.constant 0 : i32
    %c0_i32_0 = arith.constant 0 : i32
    %c0_i32_1 = arith.constant 0 : i32
    return %c0_i32, %c0_i32_0 : i32, i32
  }
  func.func @transform_3(%arg0: i32) -> (i32, i32) {
    %c0_i32 = arith.constant 0 : i32
    %c0_i32_0 = arith.constant 0 : i32
    %c0_i32_1 = arith.constant 0 : i32
    return %c0_i32, %c0_i32_0 : i32, i32
  }
  func.func @transform_4(%arg0: i32) -> (i32, i32) {
    %c0_i32 = arith.constant 0 : i32
    %c0_i32_0 = arith.constant 0 : i32
    %c0_i32_1 = arith.constant 0 : i32
    return %c0_i32, %c0_i32_0 : i32, i32
  }
  func.func @transform_5(%arg0: i32) -> (i32, i32) {
    %c0_i32 = arith.constant 0 : i32
    %c0_i32_0 = arith.constant 0 : i32
    return %arg0, %c0_i32 : i32, i32
  }
}

module attributes {stable_mosaic.version = 11 : i64} {
  func.func @_mlp_kernel(%arg0: i32, %arg1: memref<16x128xf32, #tpu.memory_space<vmem>>, %arg2: memref<128x128xf32, #tpu.memory_space<vmem>>, %arg3: memref<1x128xf32, #tpu.memory_space<vmem>>, %arg4: memref<128x128xf32, #tpu.memory_space<vmem>>, %arg5: memref<1x128xf32, #tpu.memory_space<vmem>>, %arg6: memref<16x128xf32, #tpu.memory_space<vmem>>) attributes {dimension_semantics = [#tpu.dimension_semantics<parallel>], iteration_bounds = array<i64: 1>, scalar_prefetch = 0 : i64, scratch_operands = 0 : i64, tpu.core_type = #tpu.core_type<tc>, window_params = [{transform_indices = @transform_0, window_bounds = array<i64: 16, 128>}, {pipeline_mode = #tpu.pipeline_mode<synchronous>, transform_indices = @transform_1, window_bounds = array<i64: 128, 128>}, {pipeline_mode = #tpu.pipeline_mode<synchronous>, transform_indices = @transform_2, window_bounds = array<i64: 1, 128>}, {pipeline_mode = #tpu.pipeline_mode<synchronous>, transform_indices = @transform_3, window_bounds = array<i64: 128, 128>}, {pipeline_mode = #tpu.pipeline_mode<synchronous>, transform_indices = @transform_4, window_bounds = array<i64: 1, 128>}, {transform_indices = @transform_5, window_bounds = array<i64: 16, 128>}]} {
    %c0 = arith.constant 0 : index
    %c0_0 = arith.constant 0 : index
    %0 = vector.load %arg1[%c0, %c0_0] : memref<16x128xf32, #tpu.memory_space<vmem>>, vector<16x128xf32>
    %c0_1 = arith.constant 0 : index
    %c0_2 = arith.constant 0 : index
    %1 = vector.load %arg2[%c0_1, %c0_2] : memref<128x128xf32, #tpu.memory_space<vmem>>, vector<128x128xf32>
    %cst = arith.constant dense<0.000000e+00> : vector<16x128xf32>
    %2 = tpu.matmul %0, %1, %cst {dimension_numbers = #tpu.dot_dimension_numbers<[1], [0], [0], [1], [0, 0, 1, 1], [], []>} : vector<16x128xf32>, vector<128x128xf32>, vector<16x128xf32> -> vector<16x128xf32>
    %c0_3 = arith.constant 0 : index
    %c0_4 = arith.constant 0 : index
    %3 = vector.load %arg3[%c0_3, %c0_4] : memref<1x128xf32, #tpu.memory_space<vmem>>, vector<1x128xf32>
    %4 = vector.broadcast %3 : vector<1x128xf32> to vector<16x128xf32>
    %5 = arith.addf %2, %4 : vector<16x128xf32>
    %cst_5 = arith.constant 0.000000e+00 : f32
    %6 = vector.broadcast %cst_5 : f32 to vector<16x128xf32>
    %7 = arith.maximumf %5, %6 : vector<16x128xf32>
    %c0_6 = arith.constant 0 : index
    %c0_7 = arith.constant 0 : index
    %8 = vector.load %arg4[%c0_6, %c0_7] : memref<128x128xf32, #tpu.memory_space<vmem>>, vector<128x128xf32>
    %cst_8 = arith.constant dense<0.000000e+00> : vector<16x128xf32>
    %9 = tpu.matmul %7, %8, %cst_8 {dimension_numbers = #tpu.dot_dimension_numbers<[1], [0], [0], [1], [0, 0, 1, 1], [], []>} : vector<16x128xf32>, vector<128x128xf32>, vector<16x128xf32> -> vector<16x128xf32>
    %c0_9 = arith.constant 0 : index
    %c0_10 = arith.constant 0 : index
    %10 = vector.load %arg5[%c0_9, %c0_10] : memref<1x128xf32, #tpu.memory_space<vmem>>, vector<1x128xf32>
    %11 = vector.broadcast %10 : vector<1x128xf32> to vector<16x128xf32>
    %12 = arith.addf %9, %11 : vector<16x128xf32>
    %c0_11 = arith.constant 0 : index
    %c0_12 = arith.constant 0 : index
    %13 = vector.load %arg6[%c0_11, %c0_12] : memref<16x128xf32, #tpu.memory_space<vmem>>, vector<16x128xf32>
    tpu.vector_store %arg6[%c0_11, %c0_12], %12 {strides = array<i32>} : memref<16x128xf32, #tpu.memory_space<vmem>>, vector<16x128xf32>,
    return
  }
  func.func @transform_0(%arg0: i32) -> (i32, i32) {
    %c0_i32 = arith.constant 0 : i32
    %c0_i32_0 = arith.constant 0 : i32
    return %arg0, %c0_i32 : i32, i32
  }
  func.func @transform_1(%arg0: i32) -> (i32, i32) {
    %c0_i32 = arith.constant 0 : i32
    %c0_i32_0 = arith.constant 0 : i32
    %c0_i32_1 = arith.constant 0 : i32
    return %c0_i32, %c0_i32_0 : i32, i32
  }
  func.func @transform_2(%arg0: i32) -> (i32, i32) {
    %c0_i32 = arith.constant 0 : i32
    %c0_i32_0 = arith.constant 0 : i32
    %c0_i32_1 = arith.constant 0 : i32
    return %c0_i32, %c0_i32_0 : i32, i32
  }
  func.func @transform_3(%arg0: i32) -> (i32, i32) {
    %c0_i32 = arith.constant 0 : i32
    %c0_i32_0 = arith.constant 0 : i32
    %c0_i32_1 = arith.constant 0 : i32
    return %c0_i32, %c0_i32_0 : i32, i32
  }
  func.func @transform_4(%arg0: i32) -> (i32, i32) {
    %c0_i32 = arith.constant 0 : i32
    %c0_i32_0 = arith.constant 0 : i32
    %c0_i32_1 = arith.constant 0 : i32
    return %c0_i32, %c0_i32_0 : i32, i32
  }
  func.func @transform_5(%arg0: i32) -> (i32, i32) {
    %c0_i32 = arith.constant 0 : i32
    %c0_i32_0 = arith.constant 0 : i32
    return %arg0, %c0_i32 : i32, i32
  }
}

</mosaic_0001>

<llo_original>
// kernel: tpu_custom_call.1
$region0: #{tpu_custom_call.1}
  #allocation0 [shape = 'u32[]', space=smem, size = 0x4, offset = 0x4, fixed_abs, tag = 'smem constant byte address 0x4 - core index']
  #allocation1 [shape = 'u32[72,128]{1,0:T(1,128)}', space=vmem, size = 0x9000, scoped, tag = 'internal scratch']
  %s0 = inlined_call_operand.hbm [shape: f32[16,128], index: 0, kind: input, shape index: {}]
  %s1 = inlined_call_operand.hbm [shape: f32[128,128], index: 1, kind: input, shape index: {}]
  %s2 = inlined_call_operand.vmem [shape: f32[1,128], index: 2, kind: input, shape index: {}]
  %s3 = inlined_call_operand.hbm [shape: f32[128,128], index: 3, kind: input, shape index: {}]
  %s4 = inlined_call_operand.vmem [shape: f32[1,128], index: 4, kind: input, shape index: {}]
  %s5 = inlined_call_operand.hbm [shape: f32[16,128], index: 5, kind: output, shape index: {}]
  %s6 = sld [smem:[#allocation0]]
  $region42: #{tpu_custom_call.1} parent=0
    _
  %s8 = ssub.s32 1, %s6
  %s9 = scalar_select 0, %s8, %s6
  $region1: #{tpu_custom_call.1} parent=0
    #allocation2 [shape = 'u8[8192]{0}', space=vmem, size = 0x2000, scoped, tag = 'input window, operand 0, single buffered']
    #allocation3 [shape = 's32[1]{0}', space=sflag, size = 0x4, scoped, tag = 'scoped memory for tpu_custom_call.1']
    #allocation4 [shape = 's32[1]{0}', space=sflag, size = 0x4, scoped, tag = 'scoped memory for tpu_custom_call.1']
    #allocation5 [shape = 'u8[65536]{0}', space=vmem, size = 0x10000, scoped, tag = 'input window, operand 1, single buffered']
    #allocation6 [shape = 's32[1]{0}', space=sflag, size = 0x4, scoped, tag = 'scoped memory for tpu_custom_call.1']
    #allocation7 [shape = 'u8[65536]{0}', space=vmem, size = 0x10000, scoped, tag = 'input window, operand 3, single buffered']
    #allocation8 [shape = 'u8[8192]{0}', space=vmem, size = 0x2000, scoped, tag = 'output window, operand 0, single buffered']
    %10 = vsyncpa [#allocation3], 0
    %11 = vsyncpa [#allocation6], 0
    %12 = vsyncpa [#allocation4], 0
    // Predicated region
    $region2: #{tpu_custom_call.1} parent=1 // pred_check
      _
    $region3: #{tpu_custom_call.1} parent=1 // pred_check_branch
      %14 = sbr.rel (0) target = $region5
    $region4: #{tpu_custom_call.1} parent=1 // pred_region
      %16 = vsyncadd [#allocation3], 0
      %s17 = sshll.u32 %s0, 4
      %s18 = int_to_ptr.hbm [resolvable:$true] %s17
      %s19 = sshll.u32 [#allocation2], 4
      %s20 = int_to_ptr.vmem [resolvable:$true] %s19
      %25 = dma.hbm_to_vmem [thread:$0]  %s18, 256, %s20, [#allocation3], 128, 128, 8
    $region5: #{tpu_custom_call.1} parent=1 // pred_fallthru
      _
    // Predicated region
    $region6: #{tpu_custom_call.1} parent=1 // pred_check
      _
    $region7: #{tpu_custom_call.1} parent=1 // pred_check_branch
      %27 = sbr.rel (0) target = $region9
    $region8: #{tpu_custom_call.1} parent=1 // pred_region
      %29 = vsyncadd [#allocation6], 0
      %s30 = sshll.u32 %s1, 4
      %s31 = int_to_ptr.hbm [resolvable:$true] %s30
      %s32 = sshll.u32 [#allocation5], 4
      %s33 = int_to_ptr.vmem [resolvable:$true] %s32
      %38 = dma.hbm_to_vmem [thread:$0]  %s31, 2048, %s33, [#allocation6], 128, 128, 8
    $region9: #{tpu_custom_call.1} parent=1 // pred_fallthru
      _
    // Predicated region
    $region10: #{tpu_custom_call.1} parent=1 // pred_check
      _
    $region11: #{tpu_custom_call.1} parent=1 // pred_check_branch
      %40 = sbr.rel (0) target = $region13
    $region12: #{tpu_custom_call.1} parent=1 // pred_region
      _
    $region13: #{tpu_custom_call.1} parent=1 // pred_fallthru
      _
    // Predicated region
    $region14: #{tpu_custom_call.1} parent=1 // pred_check
      _
    $region15: #{tpu_custom_call.1} parent=1 // pred_check_branch
      %42 = sbr.rel (0) target = $region17
    $region16: #{tpu_custom_call.1} parent=1 // pred_region
      %44 = vsyncadd [#allocation6], 0
      %s45 = sshll.u32 %s3, 4
      %s46 = int_to_ptr.hbm [resolvable:$true] %s45
      %s47 = sshll.u32 [#allocation7], 4
      %s48 = int_to_ptr.vmem [resolvable:$true] %s47
      %53 = dma.hbm_to_vmem [thread:$0]  %s46, 2048, %s48, [#allocation6], 128, 128, 8
    $region17: #{tpu_custom_call.1} parent=1 // pred_fallthru
      _
    // Predicated region
    $region18: #{tpu_custom_call.1} parent=1 // pred_check
      _
    $region19: #{tpu_custom_call.1} parent=1 // pred_check_branch
      %55 = sbr.rel (0) target = $region21
    $region20: #{tpu_custom_call.1} parent=1 // pred_region
      _
    $region21: #{tpu_custom_call.1} parent=1 // pred_fallthru
      _
    // Predicated region
    $region22: #{tpu_custom_call.1} parent=1 // pred_check
      _
    $region23: #{tpu_custom_call.1} parent=1 // pred_check_branch
      %57 = sbr.rel (0) target = $region25
    $region24: #{tpu_custom_call.1} parent=1 // pred_region
      %59 = dma.done [#allocation3], 256
    $region25: #{tpu_custom_call.1} parent=1 // pred_fallthru
      _
    // Predicated region
    $region26: #{tpu_custom_call.1} parent=1 // pred_check
      _
    $region27: #{tpu_custom_call.1} parent=1 // pred_check_branch
      %61 = sbr.rel (0) target = $region29
    $region28: #{tpu_custom_call.1} parent=1 // pred_region
      %63 = dma.done [#allocation6], 2048
    $region29: #{tpu_custom_call.1} parent=1 // pred_fallthru
      _
    // Predicated region
    $region30: #{tpu_custom_call.1} parent=1 // pred_check
      _
    $region31: #{tpu_custom_call.1} parent=1 // pred_check_branch
      %65 = sbr.rel (0) target = $region33
    $region32: #{tpu_custom_call.1} parent=1 // pred_region
      %67 = dma.done [#allocation6], 2048
    $region33: #{tpu_custom_call.1} parent=1 // pred_fallthru
      _
    %v68 = vld [vmem:[#allocation2] sm:$0xff]
    %v69 = vld [vmem:[#allocation2 + $0x8] sm:$0xff]
    %v70 = vld [vmem:[#allocation5] sm:$0xff]
    %v71 = vld [vmem:[#allocation5 + $0x8] sm:$0xff]
    %v72 = vld [vmem:[#allocation5 + $0x10] sm:$0xff]
    %v73 = vld [vmem:[#allocation5 + $0x18] sm:$0xff]
    %v74 = vld [vmem:[#allocation5 + $0x20] sm:$0xff]
    %v75 = vld [vmem:[#allocation5 + $0x28] sm:$0xff]
    %v76 = vld [vmem:[#allocation5 + $0x30] sm:$0xff]
    %v77 = vld [vmem:[#allocation5 + $0x38] sm:$0xff]
    %v78 = vld [vmem:[#allocation5 + $0x40] sm:$0xff]
    %v79 = vld [vmem:[#allocation5 + $0x48] sm:$0xff]
    %v80 = vld [vmem:[#allocation5 + $0x50] sm:$0xff]
    %v81 = vld [vmem:[#allocation5 + $0x58] sm:$0xff]
    %v82 = vld [vmem:[#allocation5 + $0x60] sm:$0xff]
    %v83 = vld [vmem:[#allocation5 + $0x68] sm:$0xff]
    %v84 = vld [vmem:[#allocation5 + $0x70] sm:$0xff]
    %v85 = vld [vmem:[#allocation5 + $0x78] sm:$0xff]
    %v86 = vld [vmem:[%s2] sm:$0x1]
    %v88 = vperm.slane %v86, 0
    %90 = vmatpush.msra.mxu0 %v85
    %91 = vmatpush.msra.mxu0 %v84
    %92 = vmatpush.msra.mxu0 %v83
    %93 = vmatpush.msra.mxu0 %v82
    %94 = vmatpush.msra.mxu0 %v81
    %95 = vmatpush.msra.mxu0 %v80
    %96 = vmatpush.msra.mxu0 %v79
    %97 = vmatpush.msra.mxu0 %v78
    %98 = vmatpush.msra.mxu0 %v77
    %99 = vmatpush.msra.mxu0 %v76
    %100 = vmatpush.msra.mxu0 %v75
    %101 = vmatpush.msra.mxu0 %v74
    %102 = vmatpush.msra.mxu0 %v73
    %103 = vmatpush.msra.mxu0 %v72
    %104 = vmatpush.msra.mxu0 %v71
    %105 = vmatpush.msra.mxu0 %v70
    %106 = vmatmul.f32.gmra.mxu0 %v68
    %v107 = vpop.f32.mrf.mxu0
    %v108 = vadd.f32 %v88, %v107
    %109 = vmatmul.f32.gmra.mxu0 %v69
    %v110 = vpop.f32.mrf.mxu0
    %v111 = vadd.f32 %v88, %v110
    %112 = vdwg.mxu0
    %v113 = vmax.f32 %v108, 0.0
    %v114 = vmax.f32 %v111, 0.0
    %v115 = vld [vmem:[#allocation7] sm:$0xff]
    %v116 = vld [vmem:[#allocation7 + $0x8] sm:$0xff]
    %v117 = vld [vmem:[#allocation7 + $0x10] sm:$0xff]
    %v118 = vld [vmem:[#allocation7 + $0x18] sm:$0xff]
    %v119 = vld [vmem:[#allocation7 + $0x20] sm:$0xff]
    %v120 = vld [vmem:[#allocation7 + $0x28] sm:$0xff]
    %v121 = vld [vmem:[#allocation7 + $0x30] sm:$0xff]
    %v122 = vld [vmem:[#allocation7 + $0x38] sm:$0xff]
    %v123 = vld [vmem:[#allocation7 + $0x40] sm:$0xff]
    %v124 = vld [vmem:[#allocation7 + $0x48] sm:$0xff]
    %v125 = vld [vmem:[#allocation7 + $0x50] sm:$0xff]
    %v126 = vld [vmem:[#allocation7 + $0x58] sm:$0xff]
    %v127 = vld [vmem:[#allocation7 + $0x60] sm:$0xff]
    %v128 = vld [vmem:[#allocation7 + $0x68] sm:$0xff]
    %v129 = vld [vmem:[#allocation7 + $0x70] sm:$0xff]
    %v130 = vld [vmem:[#allocation7 + $0x78] sm:$0xff]
    %v131 = vld [vmem:[%s4] sm:$0x1]
    %v133 = vperm.slane %v131, 0
    %135 = vmatpush.msra.mxu0 %v130
    %136 = vmatpush.msra.mxu0 %v129
    %137 = vmatpush.msra.mxu0 %v128
    %138 = vmatpush.msra.mxu0 %v127
    %139 = vmatpush.msra.mxu0 %v126
    %140 = vmatpush.msra.mxu0 %v125
    %141 = vmatpush.msra.mxu0 %v124
    %142 = vmatpush.msra.mxu0 %v123
    %143 = vmatpush.msra.mxu0 %v122
    %144 = vmatpush.msra.mxu0 %v121
    %145 = vmatpush.msra.mxu0 %v120
    %146 = vmatpush.msra.mxu0 %v119
    %147 = vmatpush.msra.mxu0 %v118
    %148 = vmatpush.msra.mxu0 %v117
    %149 = vmatpush.msra.mxu0 %v116
    %150 = vmatpush.msra.mxu0 %v115
    %151 = vmatmul.f32.gmra.mxu0 %v113
    %v152 = vpop.f32.mrf.mxu0
    %v153 = vadd.f32 %v133, %v152
    %154 = vmatmul.f32.gmra.mxu0 %v114
    %v155 = vpop.f32.mrf.mxu0
    %v156 = vadd.f32 %v133, %v155
    %157 = vdwg.mxu0
    %158 = vst [vmem:[#allocation8] sm:$0xff] %v153
    %159 = vst [vmem:[#allocation8 + $0x8] sm:$0xff] %v156
    // Predicated region
    $region34: #{tpu_custom_call.1} parent=1 // pred_check
      _
    $region35: #{tpu_custom_call.1} parent=1 // pred_check_branch
      %161 = sbr.rel (0) target = $region37
    $region36: #{tpu_custom_call.1} parent=1 // pred_region
      %163 = vsyncadd [#allocation4], 0
      %s164 = sshll.u32 [#allocation8], 4
      %s165 = int_to_ptr.vmem [resolvable:$true] %s164
      %s166 = sshll.u32 %s5, 4
      %s167 = int_to_ptr.hbm [resolvable:$true] %s166
      %172 = dma.vmem_to_hbm [thread:$0]  %s165, 256, %s167, [#allocation4], 128, 128, 8
    $region37: #{tpu_custom_call.1} parent=1 // pred_fallthru
      _
    // Predicated region
    $region38: #{tpu_custom_call.1} parent=1 // pred_check
      _
    $region39: #{tpu_custom_call.1} parent=1 // pred_check_branch
      %174 = sbr.rel (0) target = $region41
    $region40: #{tpu_custom_call.1} parent=1 // pred_region
      %176 = dma.done [#allocation4], 256
    $region41: #{tpu_custom_call.1} parent=1 // pred_fallthru
      _
    %177 = vsyncpa [#allocation3], 1
    %178 = vsyncpa [#allocation6], 1
    %179 = vsyncpa [#allocation4], 1

// kernel: tpu_custom_call.1
$region0: #{tpu_custom_call.1}
  #allocation0 [shape = 'u32[]', space=smem, size = 0x4, offset = 0x4, fixed_abs, tag = 'smem constant byte address 0x4 - core index']
  #allocation1 [shape = 'u32[72,128]{1,0:T(1,128)}', space=vmem, size = 0x9000, scoped, tag = 'internal scratch']
  %s0 = inlined_call_operand.hbm [shape: f32[16,128], index: 0, kind: input, shape index: {}]
  %s1 = inlined_call_operand.hbm [shape: f32[128,128], index: 1, kind: input, shape index: {}]
  %s2 = inlined_call_operand.vmem [shape: f32[1,128], index: 2, kind: input, shape index: {}]
  %s3 = inlined_call_operand.hbm [shape: f32[128,128], index: 3, kind: input, shape index: {}]
  %s4 = inlined_call_operand.vmem [shape: f32[1,128], index: 4, kind: input, shape index: {}]
  %s5 = inlined_call_operand.hbm [shape: f32[16,128], index: 5, kind: output, shape index: {}]
  %s6 = sld [smem:[#allocation0]]
  $region42: #{tpu_custom_call.1} parent=0
    _
  %s8 = ssub.s32 1, %s6
  %s9 = scalar_select 0, %s8, %s6
  $region1: #{tpu_custom_call.1} parent=0
    #allocation2 [shape = 'u8[8192]{0}', space=vmem, size = 0x2000, scoped, tag = 'input window, operand 0, single buffered']
    #allocation3 [shape = 's32[1]{0}', space=sflag, size = 0x4, scoped, tag = 'scoped memory for tpu_custom_call.1']
    #allocation4 [shape = 's32[1]{0}', space=sflag, size = 0x4, scoped, tag = 'scoped memory for tpu_custom_call.1']
    #allocation5 [shape = 'u8[65536]{0}', space=vmem, size = 0x10000, scoped, tag = 'input window, operand 1, single buffered']
    #allocation6 [shape = 's32[1]{0}', space=sflag, size = 0x4, scoped, tag = 'scoped memory for tpu_custom_call.1']
    #allocation7 [shape = 'u8[65536]{0}', space=vmem, size = 0x10000, scoped, tag = 'input window, operand 3, single buffered']
    #allocation8 [shape = 'u8[8192]{0}', space=vmem, size = 0x2000, scoped, tag = 'output window, operand 0, single buffered']
    %10 = vsyncpa [#allocation3], 0
    %11 = vsyncpa [#allocation6], 0
    %12 = vsyncpa [#allocation4], 0
    // Predicated region
    $region2: #{tpu_custom_call.1} parent=1 // pred_check
      _
    $region3: #{tpu_custom_call.1} parent=1 // pred_check_branch
      %14 = sbr.rel (0) target = $region5
    $region4: #{tpu_custom_call.1} parent=1 // pred_region
      %16 = vsyncadd [#allocation3], 0
      %s17 = sshll.u32 %s0, 4
      %s18 = int_to_ptr.hbm [resolvable:$true] %s17
      %s19 = sshll.u32 [#allocation2], 4
      %s20 = int_to_ptr.vmem [resolvable:$true] %s19
      %25 = dma.hbm_to_vmem [thread:$0]  %s18, 256, %s20, [#allocation3], 128, 128, 8
    $region5: #{tpu_custom_call.1} parent=1 // pred_fallthru
      _
    // Predicated region
    $region6: #{tpu_custom_call.1} parent=1 // pred_check
      _
    $region7: #{tpu_custom_call.1} parent=1 // pred_check_branch
      %27 = sbr.rel (0) target = $region9
    $region8: #{tpu_custom_call.1} parent=1 // pred_region
      %29 = vsyncadd [#allocation6], 0
      %s30 = sshll.u32 %s1, 4
      %s31 = int_to_ptr.hbm [resolvable:$true] %s30
      %s32 = sshll.u32 [#allocation5], 4
      %s33 = int_to_ptr.vmem [resolvable:$true] %s32
      %38 = dma.hbm_to_vmem [thread:$0]  %s31, 2048, %s33, [#allocation6], 128, 128, 8
    $region9: #{tpu_custom_call.1} parent=1 // pred_fallthru
      _
    // Predicated region
    $region10: #{tpu_custom_call.1} parent=1 // pred_check
      _
    $region11: #{tpu_custom_call.1} parent=1 // pred_check_branch
      %40 = sbr.rel (0) target = $region13
    $region12: #{tpu_custom_call.1} parent=1 // pred_region
      _
    $region13: #{tpu_custom_call.1} parent=1 // pred_fallthru
      _
    // Predicated region
    $region14: #{tpu_custom_call.1} parent=1 // pred_check
      _
    $region15: #{tpu_custom_call.1} parent=1 // pred_check_branch
      %42 = sbr.rel (0) target = $region17
    $region16: #{tpu_custom_call.1} parent=1 // pred_region
      %44 = vsyncadd [#allocation6], 0
      %s45 = sshll.u32 %s3, 4
      %s46 = int_to_ptr.hbm [resolvable:$true] %s45
      %s47 = sshll.u32 [#allocation7], 4
      %s48 = int_to_ptr.vmem [resolvable:$true] %s47
      %53 = dma.hbm_to_vmem [thread:$0]  %s46, 2048, %s48, [#allocation6], 128, 128, 8
    $region17: #{tpu_custom_call.1} parent=1 // pred_fallthru
      _
    // Predicated region
    $region18: #{tpu_custom_call.1} parent=1 // pred_check
      _
    $region19: #{tpu_custom_call.1} parent=1 // pred_check_branch
      %55 = sbr.rel (0) target = $region21
    $region20: #{tpu_custom_call.1} parent=1 // pred_region
      _
    $region21: #{tpu_custom_call.1} parent=1 // pred_fallthru
      _
    // Predicated region
    $region22: #{tpu_custom_call.1} parent=1 // pred_check
      _
    $region23: #{tpu_custom_call.1} parent=1 // pred_check_branch
      %57 = sbr.rel (0) target = $region25
    $region24: #{tpu_custom_call.1} parent=1 // pred_region
      %59 = dma.done [#allocation3], 256
    $region25: #{tpu_custom_call.1} parent=1 // pred_fallthru
      _
    // Predicated region
    $region26: #{tpu_custom_call.1} parent=1 // pred_check
      _
    $region27: #{tpu_custom_call.1} parent=1 // pred_check_branch
      %61 = sbr.rel (0) target = $region29
    $region28: #{tpu_custom_call.1} parent=1 // pred_region
      %63 = dma.done [#allocation6], 2048
    $region29: #{tpu_custom_call.1} parent=1 // pred_fallthru
      _
    // Predicated region
    $region30: #{tpu_custom_call.1} parent=1 // pred_check
      _
    $region31: #{tpu_custom_call.1} parent=1 // pred_check_branch
      %65 = sbr.rel (0) target = $region33
    $region32: #{tpu_custom_call.1} parent=1 // pred_region
      %67 = dma.done [#allocation6], 2048
    $region33: #{tpu_custom_call.1} parent=1 // pred_fallthru
      _
    %v68 = vld [vmem:[#allocation2] sm:$0xff]
    %v69 = vld [vmem:[#allocation2 + $0x8] sm:$0xff]
    %v70 = vld [vmem:[#allocation5] sm:$0xff]
    %v71 = vld [vmem:[#allocation5 + $0x8] sm:$0xff]
    %v72 = vld [vmem:[#allocation5 + $0x10] sm:$0xff]
    %v73 = vld [vmem:[#allocation5 + $0x18] sm:$0xff]
    %v74 = vld [vmem:[#allocation5 + $0x20] sm:$0xff]
    %v75 = vld [vmem:[#allocation5 + $0x28] sm:$0xff]
    %v76 = vld [vmem:[#allocation5 + $0x30] sm:$0xff]
    %v77 = vld [vmem:[#allocation5 + $0x38] sm:$0xff]
    %v78 = vld [vmem:[#allocation5 + $0x40] sm:$0xff]
    %v79 = vld [vmem:[#allocation5 + $0x48] sm:$0xff]
    %v80 = vld [vmem:[#allocation5 + $0x50] sm:$0xff]
    %v81 = vld [vmem:[#allocation5 + $0x58] sm:$0xff]
    %v82 = vld [vmem:[#allocation5 + $0x60] sm:$0xff]
    %v83 = vld [vmem:[#allocation5 + $0x68] sm:$0xff]
    %v84 = vld [vmem:[#allocation5 + $0x70] sm:$0xff]
    %v85 = vld [vmem:[#allocation5 + $0x78] sm:$0xff]
    %v86 = vld [vmem:[%s2] sm:$0x1]
    %v88 = vperm.slane %v86, 0
    %90 = vmatpush.msra.mxu0 %v85
    %91 = vmatpush.msra.mxu0 %v84
    %92 = vmatpush.msra.mxu0 %v83
    %93 = vmatpush.msra.mxu0 %v82
    %94 = vmatpush.msra.mxu0 %v81
    %95 = vmatpush.msra.mxu0 %v80
    %96 = vmatpush.msra.mxu0 %v79
    %97 = vmatpush.msra.mxu0 %v78
    %98 = vmatpush.msra.mxu0 %v77
    %99 = vmatpush.msra.mxu0 %v76
    %100 = vmatpush.msra.mxu0 %v75
    %101 = vmatpush.msra.mxu0 %v74
    %102 = vmatpush.msra.mxu0 %v73
    %103 = vmatpush.msra.mxu0 %v72
    %104 = vmatpush.msra.mxu0 %v71
    %105 = vmatpush.msra.mxu0 %v70
    %106 = vmatmul.f32.gmra.mxu0 %v68
    %v107 = vpop.f32.mrf.mxu0
    %v108 = vadd.f32 %v88, %v107
    %109 = vmatmul.f32.gmra.mxu0 %v69
    %v110 = vpop.f32.mrf.mxu0
    %v111 = vadd.f32 %v88, %v110
    %112 = vdwg.mxu0
    %v113 = vmax.f32 %v108, 0.0
    %v114 = vmax.f32 %v111, 0.0
    %v115 = vld [vmem:[#allocation7] sm:$0xff]
    %v116 = vld [vmem:[#allocation7 + $0x8] sm:$0xff]
    %v117 = vld [vmem:[#allocation7 + $0x10] sm:$0xff]
    %v118 = vld [vmem:[#allocation7 + $0x18] sm:$0xff]
    %v119 = vld [vmem:[#allocation7 + $0x20] sm:$0xff]
    %v120 = vld [vmem:[#allocation7 + $0x28] sm:$0xff]
    %v121 = vld [vmem:[#allocation7 + $0x30] sm:$0xff]
    %v122 = vld [vmem:[#allocation7 + $0x38] sm:$0xff]
    %v123 = vld [vmem:[#allocation7 + $0x40] sm:$0xff]
    %v124 = vld [vmem:[#allocation7 + $0x48] sm:$0xff]
    %v125 = vld [vmem:[#allocation7 + $0x50] sm:$0xff]
    %v126 = vld [vmem:[#allocation7 + $0x58] sm:$0xff]
    %v127 = vld [vmem:[#allocation7 + $0x60] sm:$0xff]
    %v128 = vld [vmem:[#allocation7 + $0x68] sm:$0xff]
    %v129 = vld [vmem:[#allocation7 + $0x70] sm:$0xff]
    %v130 = vld [vmem:[#allocation7 + $0x78] sm:$0xff]
    %v131 = vld [vmem:[%s4] sm:$0x1]
    %v133 = vperm.slane %v131, 0
    %135 = vmatpush.msra.mxu0 %v130
    %136 = vmatpush.msra.mxu0 %v129
    %137 = vmatpush.msra.mxu0 %v128
    %138 = vmatpush.msra.mxu0 %v127
    %139 = vmatpush.msra.mxu0 %v126
    %140 = vmatpush.msra.mxu0 %v125
    %141 = vmatpush.msra.mxu0 %v124
    %142 = vmatpush.msra.mxu0 %v123
    %143 = vmatpush.msra.mxu0 %v122
    %144 = vmatpush.msra.mxu0 %v121
    %145 = vmatpush.msra.mxu0 %v120
    %146 = vmatpush.msra.mxu0 %v119
    %147 = vmatpush.msra.mxu0 %v118
    %148 = vmatpush.msra.mxu0 %v117
    %149 = vmatpush.msra.mxu0 %v116
    %150 = vmatpush.msra.mxu0 %v115
    %151 = vmatmul.f32.gmra.mxu0 %v113
    %v152 = vpop.f32.mrf.mxu0
    %v153 = vadd.f32 %v133, %v152
    %154 = vmatmul.f32.gmra.mxu0 %v114
    %v155 = vpop.f32.mrf.mxu0
    %v156 = vadd.f32 %v133, %v155
    %157 = vdwg.mxu0
    %158 = vst [vmem:[#allocation8] sm:$0xff] %v153
    %159 = vst [vmem:[#allocation8 + $0x8] sm:$0xff] %v156
    // Predicated region
    $region34: #{tpu_custom_call.1} parent=1 // pred_check
      _
    $region35: #{tpu_custom_call.1} parent=1 // pred_check_branch
      %161 = sbr.rel (0) target = $region37
    $region36: #{tpu_custom_call.1} parent=1 // pred_region
      %163 = vsyncadd [#allocation4], 0
      %s164 = sshll.u32 [#allocation8], 4
      %s165 = int_to_ptr.vmem [resolvable:$true] %s164
      %s166 = sshll.u32 %s5, 4
      %s167 = int_to_ptr.hbm [resolvable:$true] %s166
      %172 = dma.vmem_to_hbm [thread:$0]  %s165, 256, %s167, [#allocation4], 128, 128, 8
    $region37: #{tpu_custom_call.1} parent=1 // pred_fallthru
      _
    // Predicated region
    $region38: #{tpu_custom_call.1} parent=1 // pred_check
      _
    $region39: #{tpu_custom_call.1} parent=1 // pred_check_branch
      %174 = sbr.rel (0) target = $region41
    $region40: #{tpu_custom_call.1} parent=1 // pred_region
      %176 = dma.done [#allocation4], 256
    $region41: #{tpu_custom_call.1} parent=1 // pred_fallthru
      _
    %177 = vsyncpa [#allocation3], 1
    %178 = vsyncpa [#allocation6], 1
    %179 = vsyncpa [#allocation4], 1

</llo_original>
